<compile_context>
chip_gen: v7x
topology: tpu7x:2x2x1
jax: 0.10.0
libtpu: 0.0.40
codegen_flags: <defaults>
</compile_context>

<pallas_src>
import functools

import jax
import jax.numpy as jnp
from jax import lax
from jax.experimental import pallas as pl
from jax.experimental.pallas import tpu as pltpu

_LANE = 128
_SUB = 8
_ROW_ALIGN = 32           # satisfies f32 (8,128), bf16 (16,128), int8 (32,128)
_MAX_BLOCK_ROWS = 8192    # (8192,128): 4 MiB f32 / 2 MiB bf16 / 1 MiB u8 per buf
_MIN_KERNEL_ROWS = _ROW_ALIGN


def _keep_mask(t_raw, t_f32, ignore_index):
    """mask = (targets != ignore_index), compared in the safest/cheapest dtype."""
    dt = t_raw.dtype
    if jnp.issubdtype(dt, jnp.integer):
        info = jnp.iinfo(dt)
        if info.min <= int(ignore_index) <= info.max:
            return t_raw != jnp.asarray(ignore_index, dt)
        # ignore_index is not representable in this dtype -> nothing matches.
        return jnp.ones(t_raw.shape, dtype=jnp.bool_)
    return t_f32 != jnp.float32(ignore_index)


def _masked_sums(o, t_raw, ignore_index):
    """Plain-JAX helper: (sum(o*t*m), sum((o+t)*m)) in f32 (tiny tails only)."""
    o32 = o.astype(jnp.float32)
    t32 = t_raw.astype(jnp.float32)
    keep = _keep_mask(t_raw, t32, ignore_index)
    s_ot = jnp.sum(jnp.where(keep, o32 * t32, 0.0))
    s_opt = jnp.sum(jnp.where(keep, o32 + t32, 0.0))
    return s_ot, s_opt


def _iou_sums_kernel(o_ref, t_ref, ot_ref, opt_ref, *, steps_per_shard,
                     num_blocks, full_blocks, tail_rows, chunk, unroll,
                     ignore_index):
    c = pl.program_id(0)               # shard (parallel axis)
    s = pl.program_id(1)               # step within shard (arbitrary axis)
    g = c * steps_per_shard + s        # global block index

    @pl.when(s == 0)
    def _():
        ot_ref[...] = jnp.zeros_like(ot_ref)
        opt_ref[...] = jnp.zeros_like(opt_ref)

    def chunk_sums(ci, valid_rows):
        r0 = pl.multiple_of(ci * chunk, chunk)
        o = o_ref[pl.ds(r0, chunk), :].astype(jnp.float32)
        t_raw = t_ref[pl.ds(r0, chunk), :]
        t = t_raw.astype(jnp.float32)
        keep = _keep_mask(t_raw, t, ignore_index)
        if valid_rows is not None:
            ridx = lax.broadcasted_iota(jnp.int32, (chunk, 1), 0) + r0
            keep = jnp.logical_and(keep, ridx < valid_rows)
        d_ot = jnp.where(keep, o * t, 0.0)          # select-to-zero: OOB/NaN safe
        d_opt = jnp.where(keep, o + t, 0.0)
        return (d_ot.reshape(chunk // _SUB, _SUB, _LANE).sum(axis=0),
                d_opt.reshape(chunk // _SUB, _SUB, _LANE).sum(axis=0))

    def accumulate(n_chunks, valid_rows, loop_unroll):
        def body(ci, carry):
            a, b = carry
            da, db = chunk_sums(ci, valid_rows)
            return a + da, b + db

        zero = jnp.zeros((_SUB, _LANE), jnp.float32)
        pa, pb = lax.fori_loop(0, n_chunks, body, (zero, zero),
                               unroll=loop_unroll)
        ot_ref[...] += pa[None]
        opt_ref[...] += pb[None]

    block_rows = o_ref.shape[0]

    # Steady state: full blocks, no row masking at all.
    @pl.when(g < full_blocks)
    def _():
        accumulate(block_rows // chunk, None, unroll)

    # At most one partial tail block; only traced when it exists and runtime
    # gated so its masking cost never touches the steady-state blocks.
    if tail_rows:
        n_tail_chunks = -(-tail_rows // chunk)

        @pl.when(g == num_blocks - 1)
        def _():
            accumulate(n_tail_chunks, tail_rows, min(unroll, n_tail_chunks))


def iou_loss(outputs, targets, *, ignore_index=255):
    """JAX/Pallas equivalent of IoULoss.forward (returns a f32 scalar)."""
    o_flat = outputs.reshape(-1)
    t_flat = targets.reshape(-1)
    n = o_flat.shape[0]

    rows = n // _LANE
    rem = n - rows * _LANE

    if rows < _MIN_KERNEL_ROWS:
        # Too small to be worth a kernel launch: plain-JAX fallback.
        s_ot, s_opt = _masked_sums(o_flat, t_flat, ignore_index)
        return 1.0 - s_ot / (s_opt - s_ot)

    if rows >= _MAX_BLOCK_ROWS:
        block_rows = _MAX_BLOCK_ROWS
    else:
        block_rows = (rows // _ROW_ALIGN) * _ROW_ALIGN

    num_blocks = pl.cdiv(rows, block_rows)
    full_blocks = rows // block_rows
    tail_rows = rows - full_blocks * block_rows

    shards = 2 if num_blocks >= 2 else 1
    steps_per_shard = pl.cdiv(num_blocks, shards)
    has_phantom = shards * steps_per_shard != num_blocks

    chunk = next(ck for ck in (128, 64, 32) if block_rows % ck == 0)
    unroll = min(8, block_rows // chunk)

    # Lane-dense view.  When n % 128 == 0 this is a pure reshape (no copies);
    # otherwise the prefix slice is the only extra HBM pass and the <128
    # element remainder is folded in below with plain JAX.
    o2d = o_flat[: rows * _LANE].reshape(rows, _LANE)
    t2d = t_flat[: rows * _LANE].reshape(rows, _LANE)

    def in_map(c, s):
        g = c * steps_per_shard + s
        if has_phantom:
            g = jnp.minimum(g, num_blocks - 1)   # clamp the phantom grid step
        return (g, 0)

    kernel = functools.partial(
        _iou_sums_kernel,
        steps_per_shard=steps_per_shard,
        num_blocks=num_blocks,
        full_blocks=full_blocks,
        tail_rows=tail_rows,
        chunk=chunk,
        unroll=unroll,
        ignore_index=ignore_index,
    )

    ot_slabs, opt_slabs = pl.pallas_call(
        kernel,
        out_shape=(jax.ShapeDtypeStruct((shards, _SUB, _LANE), jnp.float32),
                   jax.ShapeDtypeStruct((shards, _SUB, _LANE), jnp.float32)),
        grid_spec=pltpu.PrefetchScalarGridSpec(
            num_scalar_prefetch=0,
            grid=(shards, steps_per_shard),
            in_specs=[
                pl.BlockSpec((block_rows, _LANE), in_map),
                pl.BlockSpec((block_rows, _LANE), in_map),
            ],
            out_specs=[
                pl.BlockSpec((1, _SUB, _LANE), lambda c, s: (c, 0, 0)),
                pl.BlockSpec((1, _SUB, _LANE), lambda c, s: (c, 0, 0)),
            ],
        ),
        compiler_params=pltpu.CompilerParams(
            dimension_semantics=("parallel", "arbitrary"),
            vmem_limit_bytes=32 * 1024 * 1024,
        ),
    )(o2d, t2d)

    s_ot = jnp.sum(ot_slabs)
    s_opt = jnp.sum(opt_slabs)

    if rem:
        tail_ot, tail_opt = _masked_sums(o_flat[rows * _LANE:],
                                         t_flat[rows * _LANE:], ignore_index)
        s_ot = s_ot + tail_ot
        s_opt = s_opt + tail_opt

    # num = s_ot ; den = sum(o*m + t*m - o*t*m) = s_opt - s_ot
    return 1.0 - s_ot / (s_opt - s_ot)


def _reference_iou_loss(outputs, targets, ignore_index=255):
    o = outputs.reshape(-1).astype(jnp.float32)
    t = targets.reshape(-1).astype(jnp.float32)
    m = (t != float(ignore_index)).astype(jnp.float32)
    num = jnp.sum(o * t * m)
    den = jnp.sum(o * m + t * m - o * t * m)
    return 1.0 - num / den


if __name__ == "__main__":
    key = jax.random.PRNGKey(0)
    keys = jax.random.split(key, 12)

    # Case 1: f32 outputs / f32 targets (exact dtype semantics of the module).
    s1 = (2, 4, 32, 32)
    o1 = jax.random.uniform(keys[0], s1, dtype=jnp.float32)
    lab1 = (jax.random.uniform(keys[1], s1) > 0.7).astype(jnp.float32)
    ign1 = jax.random.uniform(keys[2], s1) > 0.9
    t1 = jnp.where(ign1, jnp.float32(255.0), lab1)
    l1 = jax.block_until_ready(iou_loss(o1, t1))
    r1 = _reference_iou_loss(o1, t1)
    assert jnp.allclose(l1, r1, rtol=1e-5, atol=1e-6), (l1, r1)

    # Case 2: bf16 outputs / uint8 targets, n % 128 != 0 -> wrapper lane tail,
    # in-kernel partial row-tail block, 2-shard grid.
    s2 = (2, 4, 100, 77)
    o2 = jax.random.uniform(keys[3], s2, dtype=jnp.float32).astype(jnp.bfloat16)
    lab2 = (jax.random.uniform(keys[4], s2) > 0.7).astype(jnp.uint8)
    ign2 = jax.random.uniform(keys[5], s2) > 0.9
    t2 = jnp.where(ign2, jnp.uint8(255), lab2)
    l2 = jax.block_until_ready(iou_loss(o2, t2))
    r2 = _reference_iou_loss(o2, t2)
    assert jnp.allclose(l2, r2, rtol=1e-4, atol=1e-5), (l2, r2)

    # Case 3: larger bf16/uint8 map: multi-block, 2-way core split with an odd
    # number of blocks (exercises the clamped phantom step) and a row tail.
    s3 = (2, 8, 340, 400)
    o3 = jax.random.uniform(keys[6], s3, dtype=jnp.float32).astype(jnp.bfloat16)
    lab3 = (jax.random.uniform(keys[7], s3) > 0.7).astype(jnp.uint8)
    ign3 = jax.random.uniform(keys[8], s3) > 0.9
    t3 = jnp.where(ign3, jnp.uint8(255), lab3)
    l3 = jax.block_until_ready(iou_loss(o3, t3))
    r3 = _reference_iou_loss(o3, t3)
    assert jnp.allclose(l3, r3, rtol=1e-4, atol=1e-5), (l3, r3)

    # Case 4: tiny input exercises the plain-JAX fallback path.
    s4 = (2, 4, 16, 16)
    o4 = jax.random.uniform(keys[9], s4, dtype=jnp.float32)
    lab4 = (jax.random.uniform(keys[10], s4) > 0.7).astype(jnp.float32)
    ign4 = jax.random.uniform(keys[11], s4) > 0.9
    t4 = jnp.where(ign4, jnp.float32(255.0), lab4)
    l4 = jax.block_until_ready(iou_loss(o4, t4))
    r4 = _reference_iou_loss(o4, t4)
    assert jnp.allclose(l4, r4, rtol=1e-5, atol=1e-6), (l4, r4)

    print("KERNEL_OK")
</pallas_src>

<mosaic_0001>
module attributes {stable_mosaic.version = 11 : i64} {
  func.func @_iou_sums_kernel(%arg0: i32, %arg1: i32, %arg2: memref<64x128xf32, #tpu.memory_space<vmem>>, %arg3: memref<64x128xf32, #tpu.memory_space<vmem>>, %arg4: memref<1x8x128xf32, #tpu.memory_space<vmem>>, %arg5: memref<1x8x128xf32, #tpu.memory_space<vmem>>) attributes {dimension_semantics = [#tpu.dimension_semantics<parallel>, #tpu.dimension_semantics<arbitrary>], iteration_bounds = array<i64: 1, 1>, scalar_prefetch = 0 : i64, scratch_operands = 0 : i64, tpu.core_type = #tpu.core_type<tc>, window_params = [{transform_indices = @transform_0, window_bounds = array<i64: 64, 128>}, {transform_indices = @transform_1, window_bounds = array<i64: 64, 128>}, {transform_indices = @transform_2, window_bounds = array<i64: 1, 8, 128>}, {transform_indices = @transform_3, window_bounds = array<i64: 1, 8, 128>}]} {
    %c1_i32 = arith.constant 1 : i32
    %0 = arith.muli %arg0, %c1_i32 : i32
    %1 = arith.addi %0, %arg1 : i32
    %c0_i32 = arith.constant 0 : i32
    %2 = arith.cmpi eq, %arg1, %c0_i32 : i32
    %3 = arith.extui %2 : i1 to i32
    %c0_i32_0 = arith.constant 0 : i32
    %4 = arith.cmpi ne, %3, %c0_i32_0 : i32
    scf.if %4 {
      %cst = arith.constant 0.000000e+00 : f32
      %8 = vector.broadcast %cst : f32 to vector<1x8x128xf32>
      %c0 = arith.constant 0 : index
      %c0_3 = arith.constant 0 : index
      %c0_4 = arith.constant 0 : index
      %9 = vector.load %arg4[%c0, %c0_3, %c0_4] : memref<1x8x128xf32, #tpu.memory_space<vmem>>, vector<1x8x128xf32>
      tpu.vector_store %arg4[%c0, %c0_3, %c0_4], %8 {strides = array<i32>} : memref<1x8x128xf32, #tpu.memory_space<vmem>>, vector<1x8x128xf32>,
      %cst_5 = arith.constant 0.000000e+00 : f32
      %10 = vector.broadcast %cst_5 : f32 to vector<1x8x128xf32>
      %c0_6 = arith.constant 0 : index
      %c0_7 = arith.constant 0 : index
      %c0_8 = arith.constant 0 : index
      %11 = vector.load %arg5[%c0_6, %c0_7, %c0_8] : memref<1x8x128xf32, #tpu.memory_space<vmem>>, vector<1x8x128xf32>
      tpu.vector_store %arg5[%c0_6, %c0_7, %c0_8], %10 {strides = array<i32>} : memref<1x8x128xf32, #tpu.memory_space<vmem>>, vector<1x8x128xf32>,
    } else {
    }
    %c1_i32_1 = arith.constant 1 : i32
    %5 = arith.cmpi slt, %1, %c1_i32_1 : i32
    %6 = arith.extui %5 : i1 to i32
    %c0_i32_2 = arith.constant 0 : i32
    %7 = arith.cmpi ne, %6, %c0_i32_2 : i32
    scf.if %7 {
      %cst = arith.constant 0.000000e+00 : f32
      %8 = vector.broadcast %cst : f32 to vector<8x128xf32>
      %c0_i32_3 = arith.constant 0 : i32
      %c64_i32 = arith.constant 64 : i32
      %9 = arith.muli %c0_i32_3, %c64_i32 : i32
      %10 = tpu.assume_multiple %9, 64 : i32
      %11 = arith.index_cast %10 : i32 to index
      %c0 = arith.constant 0 : index
      %12 = vector.load %arg2[%11, %c0] : memref<64x128xf32, #tpu.memory_space<vmem>>, vector<64x128xf32>
      %13 = arith.index_cast %10 : i32 to index
      %c0_4 = arith.constant 0 : index
      %14 = vector.load %arg3[%13, %c0_4] : memref<64x128xf32, #tpu.memory_space<vmem>>, vector<64x128xf32>
      %cst_5 = arith.constant 2.550000e+02 : f32
      %15 = vector.broadcast %cst_5 : f32 to vector<64x128xf32>
      %16 = arith.cmpf one, %14, %15 : vector<64x128xf32>
      %17 = arith.mulf %12, %14 : vector<64x128xf32>
      %cst_6 = arith.constant 0.000000e+00 : f32
      %18 = vector.broadcast %cst_6 : f32 to vector<64x128xf32>
      %19 = arith.select %16, %17, %18 : vector<64x128xi1>, vector<64x128xf32>
      %20 = arith.addf %12, %14 : vector<64x128xf32>
      %cst_7 = arith.constant 0.000000e+00 : f32
      %21 = vector.broadcast %cst_7 : f32 to vector<64x128xf32>
      %22 = arith.select %16, %20, %21 : vector<64x128xi1>, vector<64x128xf32>
      %23 = vector.shape_cast %19 : vector<64x128xf32> to vector<8x8x128xf32>
      %cst_8 = arith.constant dense<0.000000e+00> : vector<8x128xf32>
      %24 = vector.multi_reduction <add>, %23, %cst_8 [0] : vector<8x8x128xf32> to vector<8x128xf32>
      %25 = vector.shape_cast %22 : vector<64x128xf32> to vector<8x8x128xf32>
      %cst_9 = arith.constant dense<0.000000e+00> : vector<8x128xf32>
      %26 = vector.multi_reduction <add>, %25, %cst_9 [0] : vector<8x8x128xf32> to vector<8x128xf32>
      %27 = arith.addf %8, %24 : vector<8x128xf32>
      %28 = arith.addf %8, %26 : vector<8x128xf32>
      %c1_i32_10 = arith.constant 1 : i32
      %c0_11 = arith.constant 0 : index
      %c0_12 = arith.constant 0 : index
      %c0_13 = arith.constant 0 : index
      %29 = vector.load %arg4[%c0_11, %c0_12, %c0_13] : memref<1x8x128xf32, #tpu.memory_space<vmem>>, vector<1x8x128xf32>
      %30 = vector.shape_cast %27 : vector<8x128xf32> to vector<1x8x128xf32>
      %31 = arith.addf %29, %30 : vector<1x8x128xf32>
      %c0_14 = arith.constant 0 : index
      %c0_15 = arith.constant 0 : index
      %c0_16 = arith.constant 0 : index
      %32 = vector.load %arg4[%c0_14, %c0_15, %c0_16] : memref<1x8x128xf32, #tpu.memory_space<vmem>>, vector<1x8x128xf32>
      tpu.vector_store %arg4[%c0_14, %c0_15, %c0_16], %31 {strides = array<i32>} : memref<1x8x128xf32, #tpu.memory_space<vmem>>, vector<1x8x128xf32>,
      %c0_17 = arith.constant 0 : index
      %c0_18 = arith.constant 0 : index
      %c0_19 = arith.constant 0 : index
      %33 = vector.load %arg5[%c0_17, %c0_18, %c0_19] : memref<1x8x128xf32, #tpu.memory_space<vmem>>, vector<1x8x128xf32>
      %34 = vector.shape_cast %28 : vector<8x128xf32> to vector<1x8x128xf32>
      %35 = arith.addf %33, %34 : vector<1x8x128xf32>
      %c0_20 = arith.constant 0 : index
      %c0_21 = arith.constant 0 : index
      %c0_22 = arith.constant 0 : index
      %36 = vector.load %arg5[%c0_20, %c0_21, %c0_22] : memref<1x8x128xf32, #tpu.memory_space<vmem>>, vector<1x8x128xf32>
      tpu.vector_store %arg5[%c0_20, %c0_21, %c0_22], %35 {strides = array<i32>} : memref<1x8x128xf32, #tpu.memory_space<vmem>>, vector<1x8x128xf32>,
    } else {
    }
    return
  }
  func.func @transform_0(%arg0: i32, %arg1: i32) -> (i32, i32) {
    %c1_i32 = arith.constant 1 : i32
    %0 = arith.muli %arg0, %c1_i32 : i32
    %1 = arith.addi %0, %arg1 : i32
    %c0_i32 = arith.constant 0 : i32
    %c0_i32_0 = arith.constant 0 : i32
    return %1, %c0_i32 : i32, i32
  }
  func.func @transform_1(%arg0: i32, %arg1: i32) -> (i32, i32) {
    %c1_i32 = arith.constant 1 : i32
    %0 = arith.muli %arg0, %c1_i32 : i32
    %1 = arith.addi %0, %arg1 : i32
    %c0_i32 = arith.constant 0 : i32
    %c0_i32_0 = arith.constant 0 : i32
    return %1, %c0_i32 : i32, i32
  }
  func.func @transform_2(%arg0: i32, %arg1: i32) -> (i32, i32, i32) {
    %c0_i32 = arith.constant 0 : i32
    %c0_i32_0 = arith.constant 0 : i32
    %c0_i32_1 = arith.constant 0 : i32
    return %arg0, %c0_i32, %c0_i32_0 : i32, i32, i32
  }
  func.func @transform_3(%arg0: i32, %arg1: i32) -> (i32, i32, i32) {
    %c0_i32 = arith.constant 0 : i32
    %c0_i32_0 = arith.constant 0 : i32
    %c0_i32_1 = arith.constant 0 : i32
    return %arg0, %c0_i32, %c0_i32_0 : i32, i32, i32
  }
}

</mosaic_0001>

<llo_original>
// kernel: tpu_custom_call.1
$region0: #{tpu_custom_call.1}
  #allocation0 [shape = 'u32[]', space=smem, size = 0x4, offset = 0x4, fixed_abs, tag = 'smem constant byte address 0x4 - core index']
  #allocation1 [shape = 'u32[144,128]{1,0:T(1,128)}', space=vmem, size = 0x12000, scoped, tag = 'internal scratch']
  %s0 = inlined_call_operand.hbm [shape: f32[64,128], index: 0, kind: input, shape index: {}]
  %s1 = inlined_call_operand.hbm [shape: f32[64,128], index: 1, kind: input, shape index: {}]
  %s2 = inlined_call_operand.hbm [shape: f32[1,8,128], index: 2, kind: output, shape index: {0}]
  %s3 = inlined_call_operand.hbm [shape: f32[1,8,128], index: 3, kind: output, shape index: {1}]
  %4 = xla_tuple %s2, %s3
  %s5 = sld [smem:[#allocation0]]
  $region42: #{tpu_custom_call.1} parent=0
    _
  %s7 = ssub.s32 1, %s5
  %s8 = scalar_select 0, %s7, %s5
  $region1: #{tpu_custom_call.1} parent=0
    #allocation2 [shape = 'u8[32768]{0}', space=vmem, size = 0x8000, scoped, tag = 'input window, operand 0, single buffered']
    #allocation3 [shape = 's32[1]{0}', space=sflag, size = 0x4, scoped, tag = 'scoped memory for tpu_custom_call.1']
    #allocation4 [shape = 's32[1]{0}', space=sflag, size = 0x4, scoped, tag = 'scoped memory for tpu_custom_call.1']
    #allocation5 [shape = 'u8[32768]{0}', space=vmem, size = 0x8000, scoped, tag = 'input window, operand 1, single buffered']
    #allocation6 [shape = 's32[1]{0}', space=sflag, size = 0x4, scoped, tag = 'scoped memory for tpu_custom_call.1']
    #allocation7 [shape = 'u8[4096]{0}', space=vmem, size = 0x1000, scoped, tag = 'output window, operand 0, single buffered']
    #allocation8 [shape = 'u8[4096]{0}', space=vmem, size = 0x1000, scoped, tag = 'output window, operand 1, single buffered']
    #allocation9 [shape = 's32[1]{0}', space=sflag, size = 0x4, scoped, tag = 'scoped memory for tpu_custom_call.1']
    %9 = vsyncpa [#allocation3], 0
    %10 = vsyncpa [#allocation6], 0
    %11 = vsyncpa [#allocation4], 0
    %12 = vsyncpa [#allocation9], 0
    // Predicated region
    $region2: #{tpu_custom_call.1} parent=1 // pred_check
      _
    $region3: #{tpu_custom_call.1} parent=1 // pred_check_branch
      %14 = sbr.rel (0) target = $region5
    $region4: #{tpu_custom_call.1} parent=1 // pred_region
      %s15 = sadd.s32 0, 0
      %s16 = smul.u32 8, %s15
      %s18 = ssub.s32 1024, 1024
      %19 = vsyncadd [#allocation3], %s18
      %s20 = smul.addr %s16, 128
      %s21 = scalar_lea.hbm %s0, %s20
      %s22 = sshll.u32 [#allocation2], 4
      %s23 = int_to_ptr.vmem [resolvable:$true] %s22
      %28 = dma.hbm_to_vmem [thread:$0]  %s21, 1024, %s23, [#allocation3], 128, 128, 8
    $region5: #{tpu_custom_call.1} parent=1 // pred_fallthru
      _
    // Predicated region
    $region6: #{tpu_custom_call.1} parent=1 // pred_check
      _
    $region7: #{tpu_custom_call.1} parent=1 // pred_check_branch
      %30 = sbr.rel (0) target = $region9
    $region8: #{tpu_custom_call.1} parent=1 // pred_region
      %s31 = sadd.s32 0, 0
      %s32 = smul.u32 8, %s31
      %s34 = ssub.s32 1024, 1024
      %35 = vsyncadd [#allocation6], %s34
      %s36 = smul.addr %s32, 128
      %s37 = scalar_lea.hbm %s1, %s36
      %s38 = sshll.u32 [#allocation5], 4
      %s39 = int_to_ptr.vmem [resolvable:$true] %s38
      %44 = dma.hbm_to_vmem [thread:$0]  %s37, 1024, %s39, [#allocation6], 128, 128, 8
    $region9: #{tpu_custom_call.1} parent=1 // pred_fallthru
      _
    // Predicated region
    $region10: #{tpu_custom_call.1} parent=1 // pred_check
      _
    $region11: #{tpu_custom_call.1} parent=1 // pred_check_branch
      %46 = sbr.rel (0) target = $region13
    $region12: #{tpu_custom_call.1} parent=1 // pred_region
      %47 = dma.done [#allocation3], 1024
    $region13: #{tpu_custom_call.1} parent=1 // pred_fallthru
      _
    // Predicated region
    $region14: #{tpu_custom_call.1} parent=1 // pred_check
      _
    $region15: #{tpu_custom_call.1} parent=1 // pred_check_branch
      %49 = sbr.rel (0) target = $region17
    $region16: #{tpu_custom_call.1} parent=1 // pred_region
      %50 = dma.done [#allocation6], 1024
    $region17: #{tpu_custom_call.1} parent=1 // pred_fallthru
      _
    %s51 = sadd.s32 0, 0
    %s52 = smul.u32 8, %s51
    %s53 = sadd.s32 0, 0
    %s54 = smul.u32 8, %s53
    %s55 = sadd.s32 0, 0
    %p56 = scmp.eq.s32.totalorder 0, 0
    // Predicated region
    $region18: #{tpu_custom_call.1} parent=1 // pred_check
      %p57 = pneg %p56
    $region19: #{tpu_custom_call.1} parent=1 // pred_check_branch
      %59 = sbr.rel (%p57) target = $region21
    $region20: #{tpu_custom_call.1} parent=1 // pred_region
      %60 = vst [vmem:[#allocation7] sm:$0xff] 0.0
      %61 = vst [vmem:[#allocation8] sm:$0xff] 0.0
    $region21: #{tpu_custom_call.1} parent=1 // pred_fallthru
      _
    %p62 = scmp.lt.s32.totalorder %s55, 1
    // Predicated region
    $region22: #{tpu_custom_call.1} parent=1 // pred_check
      %p63 = pneg %p62
    $region23: #{tpu_custom_call.1} parent=1 // pred_check_branch
      %65 = sbr.rel (%p63) target = $region25
    $region24: #{tpu_custom_call.1} parent=1 // pred_region
      %v66 = vld [vmem:[#allocation2] sm:$0xff]
      %v67 = vld [vmem:[#allocation2 + $0x8] sm:$0xff]
      %v68 = vld [vmem:[#allocation2 + $0x10] sm:$0xff]
      %v69 = vld [vmem:[#allocation2 + $0x18] sm:$0xff]
      %v70 = vld [vmem:[#allocation2 + $0x20] sm:$0xff]
      %v71 = vld [vmem:[#allocation2 + $0x28] sm:$0xff]
      %v72 = vld [vmem:[#allocation2 + $0x30] sm:$0xff]
      %v73 = vld [vmem:[#allocation2 + $0x38] sm:$0xff]
      %v74 = vld [vmem:[#allocation5] sm:$0xff]
      %v75 = vld [vmem:[#allocation5 + $0x8] sm:$0xff]
      %v76 = vld [vmem:[#allocation5 + $0x10] sm:$0xff]
      %v77 = vld [vmem:[#allocation5 + $0x18] sm:$0xff]
      %v78 = vld [vmem:[#allocation5 + $0x20] sm:$0xff]
      %v79 = vld [vmem:[#allocation5 + $0x28] sm:$0xff]
      %v80 = vld [vmem:[#allocation5 + $0x30] sm:$0xff]
      %v81 = vld [vmem:[#allocation5 + $0x38] sm:$0xff]
      %vm82 = vcmp.ne.f32.partialorder %v74, 255.0
      %vm83 = vcmp.ne.f32.partialorder %v75, 255.0
      %vm84 = vcmp.ne.f32.partialorder %v76, 255.0
      %vm85 = vcmp.ne.f32.partialorder %v77, 255.0
      %vm86 = vcmp.ne.f32.partialorder %v78, 255.0
      %vm87 = vcmp.ne.f32.partialorder %v79, 255.0
      %vm88 = vcmp.ne.f32.partialorder %v80, 255.0
      %vm89 = vcmp.ne.f32.partialorder %v81, 255.0
      %v90 = vmul.f32 %v66, %v74
      %v91 = vmul.f32 %v67, %v75
      %v92 = vmul.f32 %v68, %v76
      %v93 = vmul.f32 %v69, %v77
      %v94 = vmul.f32 %v70, %v78
      %v95 = vmul.f32 %v71, %v79
      %v96 = vmul.f32 %v72, %v80
      %v97 = vmul.f32 %v73, %v81
      %v98 = vsel %vm82, %v90, 0.0
      %v99 = vsel %vm83, %v91, 0.0
      %v100 = vsel %vm84, %v92, 0.0
      %v101 = vsel %vm85, %v93, 0.0
      %v102 = vsel %vm86, %v94, 0.0
      %v103 = vsel %vm87, %v95, 0.0
      %v104 = vsel %vm88, %v96, 0.0
      %v105 = vsel %vm89, %v97, 0.0
      %v106 = vadd.f32 %v66, %v74
      %v107 = vadd.f32 %v67, %v75
      %v108 = vadd.f32 %v68, %v76
      %v109 = vadd.f32 %v69, %v77
      %v110 = vadd.f32 %v70, %v78
      %v111 = vadd.f32 %v71, %v79
      %v112 = vadd.f32 %v72, %v80
      %v113 = vadd.f32 %v73, %v81
      %v114 = vsel %vm82, %v106, 0.0
      %v115 = vsel %vm83, %v107, 0.0
      %v116 = vsel %vm84, %v108, 0.0
      %v117 = vsel %vm85, %v109, 0.0
      %v118 = vsel %vm86, %v110, 0.0
      %v119 = vsel %vm87, %v111, 0.0
      %v120 = vsel %vm88, %v112, 0.0
      %v121 = vsel %vm89, %v113, 0.0
      %v122 = vadd.f32 %v98, %v99
      %v123 = vadd.f32 %v122, %v100
      %v124 = vadd.f32 %v123, %v101
      %v125 = vadd.f32 %v124, %v102
      %v126 = vadd.f32 %v125, %v103
      %v127 = vadd.f32 %v126, %v104
      %v128 = vadd.f32 %v127, %v105
      %v129 = vadd.f32 %v114, %v115
      %v130 = vadd.f32 %v129, %v116
      %v131 = vadd.f32 %v130, %v117
      %v132 = vadd.f32 %v131, %v118
      %v133 = vadd.f32 %v132, %v119
      %v134 = vadd.f32 %v133, %v120
      %v135 = vadd.f32 %v134, %v121
      %v136 = vadd.f32 %v128, 0.0
      %v137 = vadd.f32 %v135, 0.0
      %v138 = vld [vmem:[#allocation7] sm:$0xff]
      %v139 = vadd.f32 %v138, %v136
      %140 = vst [vmem:[#allocation7] sm:$0xff] %v139
      %v141 = vld [vmem:[#allocation8] sm:$0xff]
      %v142 = vadd.f32 %v141, %v137
      %143 = vst [vmem:[#allocation8] sm:$0xff] %v142
    $region25: #{tpu_custom_call.1} parent=1 // pred_fallthru
      _
    // Predicated region
    $region26: #{tpu_custom_call.1} parent=1 // pred_check
      _
    $region27: #{tpu_custom_call.1} parent=1 // pred_check_branch
      %145 = sbr.rel (0) target = $region29
    $region28: #{tpu_custom_call.1} parent=1 // pred_region
      %s147 = ssub.s32 128, 128
      %148 = vsyncadd [#allocation4], %s147
      %s150 = sshll.u32 [#allocation7], 4
      %s151 = int_to_ptr.vmem [resolvable:$true] %s150
      %153 = dma.vmem_to_hbm [thread:$0]  %s151, 128, %s2, [#allocation4]
    $region29: #{tpu_custom_call.1} parent=1 // pred_fallthru
      _
    // Predicated region
    $region30: #{tpu_custom_call.1} parent=1 // pred_check
      _
    $region31: #{tpu_custom_call.1} parent=1 // pred_check_branch
      %155 = sbr.rel (0) target = $region33
    $region32: #{tpu_custom_call.1} parent=1 // pred_region
      %s157 = ssub.s32 128, 128
      %158 = vsyncadd [#allocation9], %s157
      %s160 = sshll.u32 [#allocation8], 4
      %s161 = int_to_ptr.vmem [resolvable:$true] %s160
      %163 = dma.vmem_to_hbm [thread:$0]  %s161, 128, %s3, [#allocation9]
    $region33: #{tpu_custom_call.1} parent=1 // pred_fallthru
      _
    // Predicated region
    $region34: #{tpu_custom_call.1} parent=1 // pred_check
      _
    $region35: #{tpu_custom_call.1} parent=1 // pred_check_branch
      %165 = sbr.rel (0) target = $region37
    $region36: #{tpu_custom_call.1} parent=1 // pred_region
      %166 = dma.done [#allocation4], 128
    $region37: #{tpu_custom_call.1} parent=1 // pred_fallthru
      _
    // Predicated region
    $region38: #{tpu_custom_call.1} parent=1 // pred_check
      _
    $region39: #{tpu_custom_call.1} parent=1 // pred_check_branch
      %168 = sbr.rel (0) target = $region41
    $region40: #{tpu_custom_call.1} parent=1 // pred_region
      %169 = dma.done [#allocation9], 128
    $region41: #{tpu_custom_call.1} parent=1 // pred_fallthru
      _
    %170 = vsyncpa [#allocation3], 1
    %171 = vsyncpa [#allocation6], 1
    %172 = vsyncpa [#allocation4], 1
    %173 = vsyncpa [#allocation9], 1

</llo_original>
